<compile_context>
chip_gen: v6e
topology: v6e:2x2x1
jax: 0.10.0
libtpu: 0.0.40
codegen_flags: <defaults>
</compile_context>

<pallas_src>
import functools

import jax
import jax.numpy as jnp
from jax.experimental import pallas as pl
from jax.experimental.pallas import tpu as pltpu

# Model dims (small, synthetic — matches the PyG TwoLayersFC toy setup).
NUM_FEATURES = 32
HIDDEN_FEATURES = 64
NUM_CLASSES = 8
NODES_PER_GRAPH = 16
NUM_GRAPHS = 32          # batched so the row (lane) dim is a multiple of 128
LANE = 128               # lane tile (rows live on the lane axis now)
SUBLANE = 8              # f32 sublane tile (classes live on the sublane axis)


def two_layer_fc_kernel(x_ref, w1_ref, b1_ref, w2_ref, b2_ref, out_ref,
                        *, num_classes):
    xT = x_ref[...]                                                   # [F, TM]
    # fc1 + relu  (dropout is identity in eval mode)
    h = jnp.dot(w1_ref[...], xT, preferred_element_type=jnp.float32) + b1_ref[...]
    h = jnp.maximum(h, 0.0)                                           # [H, TM]
    # fc2 + relu  (classes on the sublane axis)
    z = jnp.dot(w2_ref[...], h, preferred_element_type=jnp.float32) + b2_ref[...]
    z = jnp.maximum(z, 0.0)                                           # [C_pad, TM]
    # log_softmax over classes (sublane axis 0).  With C == 8 (== f32 sublane
    # tile) there is no padding and no masking; the static branch below only
    # triggers if num_classes is not a multiple of 8.
    if z.shape[0] != num_classes:
        sub = jax.lax.broadcasted_iota(jnp.int32, z.shape, 0)
        z = jnp.where(sub < num_classes, z, jnp.finfo(jnp.float32).min)
    m = jnp.max(z, axis=0, keepdims=True)                             # [1, TM]
    e = jnp.exp(z - m)
    s = jnp.sum(e, axis=0, keepdims=True)                             # [1, TM]
    out_ref[...] = (z - m) - jnp.log(s)


def _pick_row_tile(n_rows):
    """Row tile: 2 parallel grid steps on v7x (2 TCs), 1 step on v5e/v6e."""
    n_lane = pl.cdiv(n_rows, LANE) * LANE
    try:
        kind = jax.devices()[0].device_kind.lower()
    except Exception:  # pragma: no cover - defensive; default to single step
        kind = ""
    two_cores = ("v7" in kind) or ("7x" in kind)
    if two_cores and n_lane >= 2 * LANE:
        return (n_lane // 2 // LANE) * LANE
    return n_lane


def two_layer_fc(x, w1, b1, w2, b2, *, row_tile=None):
    """x: [N, F] f32.  PyTorch-native params: w1 [H, F], b1 [H], w2 [C, H], b2 [C]."""
    N, F = x.shape
    H = w1.shape[0]
    C = w2.shape[0]

    c_pad = pl.cdiv(C, SUBLANE) * SUBLANE
    if row_tile is None:
        row_tile = _pick_row_tile(N)
    n_pad = pl.cdiv(N, row_tile) * row_tile

    # Transposed, lane-dense layouts: rows on lanes, classes on sublanes.
    xT = x.T                                                        # [F, N]
    if n_pad != N:
        xT = jnp.pad(xT, ((0, 0), (0, n_pad - N)))
    b1c = b1.reshape(H, 1)
    w2p = w2 if c_pad == C else jnp.pad(w2, ((0, c_pad - C), (0, 0)))
    b2c = b2.reshape(C, 1)
    if c_pad != C:
        b2c = jnp.pad(b2c, ((0, c_pad - C), (0, 0)))

    grid = (n_pad // row_tile,)
    kernel = functools.partial(two_layer_fc_kernel, num_classes=C)

    # Advisory cost estimate with the *real* class count (no padding inflation).
    flops = 2 * n_pad * (F * H + H * C)
    transcendentals = n_pad * (C + 1)                  # exp per class + log per row
    bytes_accessed = 4 * (F * n_pad + w1.size + b1.size + w2p.size
                          + b2c.size + c_pad * n_pad)

    out = pl.pallas_call(
        kernel,
        out_shape=jax.ShapeDtypeStruct((c_pad, n_pad), jnp.float32),
        grid=grid,
        in_specs=[
            pl.BlockSpec((F, row_tile), lambda i: (0, i)),    # xT: tiled over row-lanes
            pl.BlockSpec((H, F), lambda i: (0, 0)),           # weights: VMEM-resident
            pl.BlockSpec((H, 1), lambda i: (0, 0)),
            pl.BlockSpec((c_pad, H), lambda i: (0, 0)),
            pl.BlockSpec((c_pad, 1), lambda i: (0, 0)),
        ],
        out_specs=pl.BlockSpec((c_pad, row_tile), lambda i: (0, i)),
        compiler_params=pltpu.CompilerParams(
            dimension_semantics=("parallel",)),               # shard row tiles across TCs (v7x)
        cost_estimate=pl.CostEstimate(
            flops=flops,
            transcendentals=transcendentals,
            bytes_accessed=bytes_accessed),
    )(xT, w1, b1c, w2p, b2c)

    return out[:C, :N].T                                      # back to [N, C]


def reference(x, w1, b1, w2, b2):
    h = jnp.maximum(x @ w1.T + b1, 0.0)
    z = jnp.maximum(h @ w2.T + b2, 0.0)
    return jax.nn.log_softmax(z, axis=1)


if __name__ == "__main__":
    key = jax.random.PRNGKey(0)
    kx, k1, k2, k3, k4 = jax.random.split(key, 5)

    # Batch of NUM_GRAPHS graphs, NODES_PER_GRAPH nodes each, stacked row-major.
    N = NUM_GRAPHS * NODES_PER_GRAPH     # 512 rows
    x = jax.random.normal(kx, (N, NUM_FEATURES), dtype=jnp.float32)

    # Deterministic param init (uniform, PyTorch-Linear-like bounds),
    # stored in PyTorch-native [out, in] layout.
    bound1 = 1.0 / (NUM_FEATURES ** 0.5)
    bound2 = 1.0 / (HIDDEN_FEATURES ** 0.5)
    w1 = jax.random.uniform(k1, (HIDDEN_FEATURES, NUM_FEATURES),
                            minval=-bound1, maxval=bound1, dtype=jnp.float32)
    b1 = jax.random.uniform(k2, (HIDDEN_FEATURES,),
                            minval=-bound1, maxval=bound1, dtype=jnp.float32)
    w2 = jax.random.uniform(k3, (NUM_CLASSES, HIDDEN_FEATURES),
                            minval=-bound2, maxval=bound2, dtype=jnp.float32)
    b2 = jax.random.uniform(k4, (NUM_CLASSES,),
                            minval=-bound2, maxval=bound2, dtype=jnp.float32)

    out = two_layer_fc(x, w1, b1, w2, b2)
    out = jax.block_until_ready(out)

    ref = reference(x, w1, b1, w2, b2)
    assert out.shape == (N, NUM_CLASSES)
    assert jnp.allclose(out, ref, atol=1e-4, rtol=1e-4), "mismatch vs reference"

    print("KERNEL_OK")
</pallas_src>

<mosaic_0001>
module attributes {stable_mosaic.version = 11 : i64} {
  func.func @two_layer_fc_kernel(%arg0: i32, %arg1: memref<32x512xf32, #tpu.memory_space<vmem>>, %arg2: memref<64x32xf32, #tpu.memory_space<vmem>>, %arg3: memref<64x1xf32, #tpu.memory_space<vmem>>, %arg4: memref<8x64xf32, #tpu.memory_space<vmem>>, %arg5: memref<8x1xf32, #tpu.memory_space<vmem>>, %arg6: memref<8x512xf32, #tpu.memory_space<vmem>>) attributes {dimension_semantics = [#tpu.dimension_semantics<parallel>], iteration_bounds = array<i64: 1>, scalar_prefetch = 0 : i64, scratch_operands = 0 : i64, tpu.core_type = #tpu.core_type<tc>, window_params = [{transform_indices = @transform_0, window_bounds = array<i64: 32, 512>}, {pipeline_mode = #tpu.pipeline_mode<synchronous>, transform_indices = @transform_1, window_bounds = array<i64: 64, 32>}, {pipeline_mode = #tpu.pipeline_mode<synchronous>, transform_indices = @transform_2, window_bounds = array<i64: 64, 1>}, {pipeline_mode = #tpu.pipeline_mode<synchronous>, transform_indices = @transform_3, window_bounds = array<i64: 8, 64>}, {pipeline_mode = #tpu.pipeline_mode<synchronous>, transform_indices = @transform_4, window_bounds = array<i64: 8, 1>}, {transform_indices = @transform_5, window_bounds = array<i64: 8, 512>}]} {
    %c0 = arith.constant 0 : index
    %c0_0 = arith.constant 0 : index
    %0 = vector.load %arg1[%c0, %c0_0] : memref<32x512xf32, #tpu.memory_space<vmem>>, vector<32x512xf32>
    %c0_1 = arith.constant 0 : index
    %c0_2 = arith.constant 0 : index
    %1 = vector.load %arg2[%c0_1, %c0_2] : memref<64x32xf32, #tpu.memory_space<vmem>>, vector<64x32xf32>
    %cst = arith.constant dense<0.000000e+00> : vector<64x512xf32>
    %2 = tpu.matmul %1, %0, %cst {dimension_numbers = #tpu.dot_dimension_numbers<[1], [0], [0], [1], [0, 0, 1, 1], [], []>} : vector<64x32xf32>, vector<32x512xf32>, vector<64x512xf32> -> vector<64x512xf32>
    %c0_3 = arith.constant 0 : index
    %c0_4 = arith.constant 0 : index
    %3 = vector.load %arg3[%c0_3, %c0_4] : memref<64x1xf32, #tpu.memory_space<vmem>>, vector<64x1xf32>
    %4 = vector.broadcast %3 : vector<64x1xf32> to vector<64x512xf32>
    %5 = arith.addf %2, %4 : vector<64x512xf32>
    %cst_5 = arith.constant 0.000000e+00 : f32
    %6 = vector.broadcast %cst_5 : f32 to vector<64x512xf32>
    %7 = arith.maximumf %5, %6 : vector<64x512xf32>
    %c0_6 = arith.constant 0 : index
    %c0_7 = arith.constant 0 : index
    %8 = vector.load %arg4[%c0_6, %c0_7] : memref<8x64xf32, #tpu.memory_space<vmem>>, vector<8x64xf32>
    %cst_8 = arith.constant dense<0.000000e+00> : vector<8x512xf32>
    %9 = tpu.matmul %8, %7, %cst_8 {dimension_numbers = #tpu.dot_dimension_numbers<[1], [0], [0], [1], [0, 0, 1, 1], [], []>} : vector<8x64xf32>, vector<64x512xf32>, vector<8x512xf32> -> vector<8x512xf32>
    %c0_9 = arith.constant 0 : index
    %c0_10 = arith.constant 0 : index
    %10 = vector.load %arg5[%c0_9, %c0_10] : memref<8x1xf32, #tpu.memory_space<vmem>>, vector<8x1xf32>
    %11 = vector.broadcast %10 : vector<8x1xf32> to vector<8x512xf32>
    %12 = arith.addf %9, %11 : vector<8x512xf32>
    %cst_11 = arith.constant 0.000000e+00 : f32
    %13 = vector.broadcast %cst_11 : f32 to vector<8x512xf32>
    %14 = arith.maximumf %12, %13 : vector<8x512xf32>
    %cst_12 = arith.constant dense<0xFF800000> : vector<512xf32>
    %15 = vector.multi_reduction <maximumf>, %14, %cst_12 [0] : vector<8x512xf32> to vector<512xf32>
    %16 = vector.shape_cast %15 : vector<512xf32> to vector<1x512xf32>
    %17 = vector.broadcast %16 : vector<1x512xf32> to vector<8x512xf32>
    %18 = arith.subf %14, %17 : vector<8x512xf32>
    %19 = math.exp %18 : vector<8x512xf32>
    %cst_13 = arith.constant dense<0.000000e+00> : vector<512xf32>
    %20 = vector.multi_reduction <add>, %19, %cst_13 [0] : vector<8x512xf32> to vector<512xf32>
    %21 = vector.shape_cast %20 : vector<512xf32> to vector<1x512xf32>
    %22 = vector.broadcast %16 : vector<1x512xf32> to vector<8x512xf32>
    %23 = arith.subf %14, %22 : vector<8x512xf32>
    %24 = math.log %21 : vector<1x512xf32>
    %25 = vector.broadcast %24 : vector<1x512xf32> to vector<8x512xf32>
    %26 = arith.subf %23, %25 : vector<8x512xf32>
    %c0_14 = arith.constant 0 : index
    %c0_15 = arith.constant 0 : index
    %27 = vector.load %arg6[%c0_14, %c0_15] : memref<8x512xf32, #tpu.memory_space<vmem>>, vector<8x512xf32>
    tpu.vector_store %arg6[%c0_14, %c0_15], %26 {strides = array<i32>} : memref<8x512xf32, #tpu.memory_space<vmem>>, vector<8x512xf32>,
    return
  }
  func.func @transform_0(%arg0: i32) -> (i32, i32) {
    %c0_i32 = arith.constant 0 : i32
    %c0_i32_0 = arith.constant 0 : i32
    return %c0_i32, %arg0 : i32, i32
  }
  func.func @transform_1(%arg0: i32) -> (i32, i32) {
    %c0_i32 = arith.constant 0 : i32
    %c0_i32_0 = arith.constant 0 : i32
    %c0_i32_1 = arith.constant 0 : i32
    return %c0_i32, %c0_i32_0 : i32, i32
  }
  func.func @transform_2(%arg0: i32) -> (i32, i32) {
    %c0_i32 = arith.constant 0 : i32
    %c0_i32_0 = arith.constant 0 : i32
    %c0_i32_1 = arith.constant 0 : i32
    return %c0_i32, %c0_i32_0 : i32, i32
  }
  func.func @transform_3(%arg0: i32) -> (i32, i32) {
    %c0_i32 = arith.constant 0 : i32
    %c0_i32_0 = arith.constant 0 : i32
    %c0_i32_1 = arith.constant 0 : i32
    return %c0_i32, %c0_i32_0 : i32, i32
  }
  func.func @transform_4(%arg0: i32) -> (i32, i32) {
    %c0_i32 = arith.constant 0 : i32
    %c0_i32_0 = arith.constant 0 : i32
    %c0_i32_1 = arith.constant 0 : i32
    return %c0_i32, %c0_i32_0 : i32, i32
  }
  func.func @transform_5(%arg0: i32) -> (i32, i32) {
    %c0_i32 = arith.constant 0 : i32
    %c0_i32_0 = arith.constant 0 : i32
    return %c0_i32, %arg0 : i32, i32
  }
}

</mosaic_0001>

<llo_original>
// kernel: tpu_custom_call.1
$region0: #{tpu_custom_call.1}
  #allocation0 [shape = 'u32[]', space=smem, size = 0x4, offset = 0x4, fixed_abs, tag = 'smem constant byte address 0x4 - core index']
  #allocation1 [shape = 'u32[144,128]{1,0:T(1,128)}', space=vmem, size = 0x12000, scoped, tag = 'internal scratch']
  %s0 = inlined_call_operand.vmem [shape: f32[32,512], index: 0, kind: input, shape index: {}]
  %s1 = inlined_call_operand.vmem [shape: f32[64,32], index: 1, kind: input, shape index: {}]
  %s2 = inlined_call_operand.vmem [shape: f32[64,1], index: 2, kind: input, shape index: {}]
  %s3 = inlined_call_operand.vmem [shape: f32[8,64], index: 3, kind: input, shape index: {}]
  %s4 = inlined_call_operand.vmem [shape: f32[8,1], index: 4, kind: input, shape index: {}]
  %s5 = inlined_call_operand.hbm [shape: f32[8,512], index: 5, kind: output, shape index: {}]
  %s6 = sld [smem:[#allocation0]]
  $region30: #{tpu_custom_call.1} parent=0
    _
  %s8 = ssub.s32 1, %s6
  %s9 = scalar_select 0, %s8, %s6
  $region1: #{tpu_custom_call.1} parent=0
    #allocation2 [shape = 'u8[16384]{0}', space=vmem, size = 0x4000, scoped, tag = 'output window, operand 0, single buffered']
    #allocation3 [shape = 's32[1]{0}', space=sflag, size = 0x4, scoped, tag = 'scoped memory for tpu_custom_call.1']
    %10 = vsyncpa [#allocation3], 0
    // Predicated region
    $region2: #{tpu_custom_call.1} parent=1 // pred_check
      _
    $region3: #{tpu_custom_call.1} parent=1 // pred_check_branch
      %12 = sbr.rel (0) target = $region5
    $region4: #{tpu_custom_call.1} parent=1 // pred_region
      _
    $region5: #{tpu_custom_call.1} parent=1 // pred_fallthru
      _
    // Predicated region
    $region6: #{tpu_custom_call.1} parent=1 // pred_check
      _
    $region7: #{tpu_custom_call.1} parent=1 // pred_check_branch
      %14 = sbr.rel (0) target = $region9
    $region8: #{tpu_custom_call.1} parent=1 // pred_region
      _
    $region9: #{tpu_custom_call.1} parent=1 // pred_fallthru
      _
    // Predicated region
    $region10: #{tpu_custom_call.1} parent=1 // pred_check
      _
    $region11: #{tpu_custom_call.1} parent=1 // pred_check_branch
      %16 = sbr.rel (0) target = $region13
    $region12: #{tpu_custom_call.1} parent=1 // pred_region
      _
    $region13: #{tpu_custom_call.1} parent=1 // pred_fallthru
      _
    // Predicated region
    $region14: #{tpu_custom_call.1} parent=1 // pred_check
      _
    $region15: #{tpu_custom_call.1} parent=1 // pred_check_branch
      %18 = sbr.rel (0) target = $region17
    $region16: #{tpu_custom_call.1} parent=1 // pred_region
      _
    $region17: #{tpu_custom_call.1} parent=1 // pred_fallthru
      _
    // Predicated region
    $region18: #{tpu_custom_call.1} parent=1 // pred_check
      _
    $region19: #{tpu_custom_call.1} parent=1 // pred_check_branch
      %20 = sbr.rel (0) target = $region21
    $region20: #{tpu_custom_call.1} parent=1 // pred_region
      _
    $region21: #{tpu_custom_call.1} parent=1 // pred_fallthru
      _
    %v21 = vld [vmem:[%s0] sm:$0xff]
    %v22 = vld [vmem:[%s0 + $0x8] sm:$0xff]
    %v23 = vld [vmem:[%s0 + $0x10] sm:$0xff]
    %v24 = vld [vmem:[%s0 + $0x18] sm:$0xff]
    %v25 = vld [vmem:[%s0 + $0x20] sm:$0xff]
    %v26 = vld [vmem:[%s0 + $0x28] sm:$0xff]
    %v27 = vld [vmem:[%s0 + $0x30] sm:$0xff]
    %v28 = vld [vmem:[%s0 + $0x38] sm:$0xff]
    %v29 = vld [vmem:[%s0 + $0x40] sm:$0xff]
    %v30 = vld [vmem:[%s0 + $0x48] sm:$0xff]
    %v31 = vld [vmem:[%s0 + $0x50] sm:$0xff]
    %v32 = vld [vmem:[%s0 + $0x58] sm:$0xff]
    %v33 = vld [vmem:[%s0 + $0x60] sm:$0xff]
    %v34 = vld [vmem:[%s0 + $0x68] sm:$0xff]
    %v35 = vld [vmem:[%s0 + $0x70] sm:$0xff]
    %v36 = vld [vmem:[%s0 + $0x78] sm:$0xff]
    %v37 = vld [vmem:[%s1] sm:$0xff]
    %v38 = vld [vmem:[%s1 + $0x8] sm:$0xff]
    %v39 = vld [vmem:[%s1 + $0x10] sm:$0xff]
    %v40 = vld [vmem:[%s1 + $0x18] sm:$0xff]
    %v41 = vld [vmem:[%s1 + $0x20] sm:$0xff]
    %v42 = vld [vmem:[%s1 + $0x28] sm:$0xff]
    %v43 = vld [vmem:[%s1 + $0x30] sm:$0xff]
    %v44 = vld [vmem:[%s1 + $0x38] sm:$0xff]
    %v45 = vld [vmem:[%s2] sm:$0xff]
    %v46 = vld [vmem:[%s2 + $0x8] sm:$0xff]
    %v47 = vld [vmem:[%s2 + $0x10] sm:$0xff]
    %v48 = vld [vmem:[%s2 + $0x18] sm:$0xff]
    %v49 = vld [vmem:[%s2 + $0x20] sm:$0xff]
    %v50 = vld [vmem:[%s2 + $0x28] sm:$0xff]
    %v51 = vld [vmem:[%s2 + $0x30] sm:$0xff]
    %v52 = vld [vmem:[%s2 + $0x38] sm:$0xff]
    %54 = vset.pattern.permute.xlu0 0
    %55 = vperm.xlu0 %54, %v45
    %v56 = vpop.permute.xlu0 %55
    %59 = vset.pattern.permute.xlu0 0
    %60 = vperm.xlu0 %59, %v46
    %v61 = vpop.permute.xlu0 %60
    %64 = vset.pattern.permute.xlu0 0
    %65 = vperm.xlu0 %64, %v47
    %v66 = vpop.permute.xlu0 %65
    %69 = vset.pattern.permute.xlu0 0
    %70 = vperm.xlu0 %69, %v48
    %v71 = vpop.permute.xlu0 %70
    %74 = vset.pattern.permute.xlu0 0
    %75 = vperm.xlu0 %74, %v49
    %v76 = vpop.permute.xlu0 %75
    %79 = vset.pattern.permute.xlu0 0
    %80 = vperm.xlu0 %79, %v50
    %v81 = vpop.permute.xlu0 %80
    %84 = vset.pattern.permute.xlu0 0
    %85 = vperm.xlu0 %84, %v51
    %v86 = vpop.permute.xlu0 %85
    %89 = vset.pattern.permute.xlu0 0
    %90 = vperm.xlu0 %89, %v52
    %v91 = vpop.permute.xlu0 %90
    %vm93 = vcmask 261120
    %v95 = vsel %vm93, %v37, 0
    %v98 = vsel %vm93, %v38, 0
    %v101 = vsel %vm93, %v39, 0
    %v104 = vsel %vm93, %v40, 0
    %v107 = vsel %vm93, %v41, 0
    %v110 = vsel %vm93, %v42, 0
    %v113 = vsel %vm93, %v43, 0
    %v116 = vsel %vm93, %v44, 0
    %118 = vmatprep.subr.mxu0 0.0
    %119 = vmatpush1.msra.mxu0 0.0
    %120 = vmatprep.subr.mxu0 0.0
    %121 = vmatpush1.msra.mxu0 0.0
    %122 = vmatprep.subr.mxu0 0.0
    %123 = vmatpush1.msra.mxu0 0.0
    %124 = vmatprep.subr.mxu0 0.0
    %125 = vmatpush1.msra.mxu0 0.0
    %126 = vmatprep.subr.mxu0 0.0
    %127 = vmatpush1.msra.mxu0 0.0
    %128 = vmatprep.subr.mxu0 0.0
    %129 = vmatpush1.msra.mxu0 0.0
    %130 = vmatprep.subr.mxu0 0.0
    %131 = vmatpush1.msra.mxu0 0.0
    %132 = vmatprep.subr.mxu0 0.0
    %133 = vmatpush1.msra.mxu0 0.0
    %134 = vmatprep.subr.mxu0 0.0
    %135 = vmatpush1.msra.mxu0 0.0
    %136 = vmatprep.subr.mxu0 0.0
    %137 = vmatpush1.msra.mxu0 0.0
    %138 = vmatprep.subr.mxu0 0.0
    %139 = vmatpush1.msra.mxu0 0.0
    %140 = vmatprep.subr.mxu0 0.0
    %141 = vmatpush1.msra.mxu0 0.0
    %142 = vmatprep.subr.mxu0 %v34
    %143 = vmatpush1.msra.mxu0 %v33
    %144 = vmatprep.subr.mxu0 %v30
    %145 = vmatpush1.msra.mxu0 %v29
    %146 = vmatprep.subr.mxu0 %v26
    %147 = vmatpush1.msra.mxu0 %v25
    %148 = vmatprep.subr.mxu0 %v22
    %149 = vmatpush1.msra.mxu0 %v21
    %150 = vmatprep.subr.mxu0 0.0
    %151 = vmatpush2.msra.mxu0 0.0
    %152 = vmatprep.subr.mxu0 0.0
    %153 = vmatpush2.msra.mxu0 0.0
    %154 = vmatprep.subr.mxu0 0.0
    %155 = vmatpush2.msra.mxu0 0.0
    %156 = vmatprep.subr.mxu0 0.0
    %157 = vmatpush2.msra.mxu0 0.0
    %158 = vmatprep.subr.mxu0 0.0
    %159 = vmatpush2.msra.mxu0 0.0
    %160 = vmatprep.subr.mxu0 0.0
    %161 = vmatpush2.msra.mxu0 0.0
    %162 = vmatprep.subr.mxu0 0.0
    %163 = vmatpush2.msra.mxu0 0.0
    %164 = vmatprep.subr.mxu0 0.0
    %165 = vmatpush2.msra.mxu0 0.0
    %166 = vmatprep.subr.mxu0 0.0
    %167 = vmatpush2.msra.mxu0 0.0
    %168 = vmatprep.subr.mxu0 0.0
    %169 = vmatpush2.msra.mxu0 0.0
    %170 = vmatprep.subr.mxu0 0.0
    %171 = vmatpush2.msra.mxu0 0.0
    %172 = vmatprep.subr.mxu0 0.0
    %173 = vmatpush2.msra.mxu0 0.0
    %174 = vmatprep.subr.mxu0 0.0
    %175 = vmatpush2.msra.mxu0 0.0
    %176 = vmatprep.subr.mxu0 0.0
    %177 = vmatpush2.msra.mxu0 0.0
    %178 = vmatprep.subr.mxu0 0.0
    %179 = vmatpush2.msra.mxu0 0.0
    %180 = vmatprep.subr.mxu0 0.0
    %181 = vmatpush2.msra.mxu0 0.0
    %182 = vmatprep.mubr.f32.mxu0 0.0
    %183 = vmatmul.mubr.f32.gmra.mxu0 %v95
    %v184 = vpop.f32.mrf.mxu0
    %v185 = vadd.f32 %v56, %v184
    %v186 = vpop.f32.mrf.mxu0
    %v187 = vadd.f32 %v56, %v186
    %188 = vmatprep.mubr.f32.mxu0 0.0
    %189 = vmatmul.mubr.f32.gmra.mxu0 %v98
    %v190 = vpop.f32.mrf.mxu0
    %v191 = vadd.f32 %v61, %v190
    %v192 = vpop.f32.mrf.mxu0
    %v193 = vadd.f32 %v61, %v192
    %194 = vmatprep.mubr.f32.mxu0 0.0
    %195 = vmatmul.mubr.f32.gmra.mxu0 %v101
    %v196 = vpop.f32.mrf.mxu0
    %v197 = vadd.f32 %v66, %v196
    %v198 = vpop.f32.mrf.mxu0
    %v199 = vadd.f32 %v66, %v198
    %200 = vmatprep.mubr.f32.mxu0 0.0
    %201 = vmatmul.mubr.f32.gmra.mxu0 %v104
    %v202 = vpop.f32.mrf.mxu0
    %v203 = vadd.f32 %v71, %v202
    %v204 = vpop.f32.mrf.mxu0
    %v205 = vadd.f32 %v71, %v204
    %206 = vmatprep.mubr.f32.mxu0 0.0
    %207 = vmatmul.mubr.f32.gmra.mxu0 %v107
    %v208 = vpop.f32.mrf.mxu0
    %v209 = vadd.f32 %v76, %v208
    %v210 = vpop.f32.mrf.mxu0
    %v211 = vadd.f32 %v76, %v210
    %212 = vmatprep.mubr.f32.mxu0 0.0
    %213 = vmatmul.mubr.f32.gmra.mxu0 %v110
    %v214 = vpop.f32.mrf.mxu0
    %v215 = vadd.f32 %v81, %v214
    %v216 = vpop.f32.mrf.mxu0
    %v217 = vadd.f32 %v81, %v216
    %218 = vmatprep.mubr.f32.mxu0 0.0
    %219 = vmatmul.mubr.f32.gmra.mxu0 %v113
    %v220 = vpop.f32.mrf.mxu0
    %v221 = vadd.f32 %v86, %v220
    %v222 = vpop.f32.mrf.mxu0
    %v223 = vadd.f32 %v86, %v222
    %224 = vmatprep.mubr.f32.mxu0 0.0
    %225 = vmatmul.mubr.f32.gmra.mxu0 %v116
    %v226 = vpop.f32.mrf.mxu0
    %v227 = vadd.f32 %v91, %v226
    %v228 = vpop.f32.mrf.mxu0
    %v229 = vadd.f32 %v91, %v228
    %230 = vdwg.mxu0
    %231 = vmatprep.subr.mxu0 0.0
    %232 = vmatpush1.msra.mxu0 0.0
    %233 = vmatprep.subr.mxu0 0.0
    %234 = vmatpush1.msra.mxu0 0.0
    %235 = vmatprep.subr.mxu0 0.0
    %236 = vmatpush1.msra.mxu0 0.0
    %237 = vmatprep.subr.mxu0 0.0
    %238 = vmatpush1.msra.mxu0 0.0
    %239 = vmatprep.subr.mxu0 0.0
    %240 = vmatpush1.msra.mxu0 0.0
    %241 = vmatprep.subr.mxu0 0.0
    %242 = vmatpush1.msra.mxu0 0.0
    %243 = vmatprep.subr.mxu0 0.0
    %244 = vmatpush1.msra.mxu0 0.0
    %245 = vmatprep.subr.mxu0 0.0
    %246 = vmatpush1.msra.mxu0 0.0
    %247 = vmatprep.subr.mxu0 0.0
    %248 = vmatpush1.msra.mxu0 0.0
    %249 = vmatprep.subr.mxu0 0.0
    %250 = vmatpush1.msra.mxu0 0.0
    %251 = vmatprep.subr.mxu0 0.0
    %252 = vmatpush1.msra.mxu0 0.0
    %253 = vmatprep.subr.mxu0 0.0
    %254 = vmatpush1.msra.mxu0 0.0
    %255 = vmatprep.subr.mxu0 %v36
    %256 = vmatpush1.msra.mxu0 %v35
    %257 = vmatprep.subr.mxu0 %v32
    %258 = vmatpush1.msra.mxu0 %v31
    %259 = vmatprep.subr.mxu0 %v28
    %260 = vmatpush1.msra.mxu0 %v27
    %261 = vmatprep.subr.mxu0 %v24
    %262 = vmatpush1.msra.mxu0 %v23
    %263 = vmatprep.subr.mxu0 0.0
    %264 = vmatpush2.msra.mxu0 0.0
    %265 = vmatprep.subr.mxu0 0.0
    %266 = vmatpush2.msra.mxu0 0.0
    %267 = vmatprep.subr.mxu0 0.0
    %268 = vmatpush2.msra.mxu0 0.0
    %269 = vmatprep.subr.mxu0 0.0
    %270 = vmatpush2.msra.mxu0 0.0
    %271 = vmatprep.subr.mxu0 0.0
    %272 = vmatpush2.msra.mxu0 0.0
    %273 = vmatprep.subr.mxu0 0.0
    %274 = vmatpush2.msra.mxu0 0.0
    %275 = vmatprep.subr.mxu0 0.0
    %276 = vmatpush2.msra.mxu0 0.0
    %277 = vmatprep.subr.mxu0 0.0
    %278 = vmatpush2.msra.mxu0 0.0
    %279 = vmatprep.subr.mxu0 0.0
    %280 = vmatpush2.msra.mxu0 0.0
    %281 = vmatprep.subr.mxu0 0.0
    %282 = vmatpush2.msra.mxu0 0.0
    %283 = vmatprep.subr.mxu0 0.0
    %284 = vmatpush2.msra.mxu0 0.0
    %285 = vmatprep.subr.mxu0 0.0
    %286 = vmatpush2.msra.mxu0 0.0
    %287 = vmatprep.subr.mxu0 0.0
    %288 = vmatpush2.msra.mxu0 0.0
    %289 = vmatprep.subr.mxu0 0.0
    %290 = vmatpush2.msra.mxu0 0.0
    %291 = vmatprep.subr.mxu0 0.0
    %292 = vmatpush2.msra.mxu0 0.0
    %293 = vmatprep.subr.mxu0 0.0
    %294 = vmatpush2.msra.mxu0 0.0
    %295 = vmatprep.mubr.f32.mxu0 0.0
    %296 = vmatmul.mubr.f32.gmra.mxu0 %v95
    %v297 = vpop.f32.mrf.mxu0
    %v298 = vadd.f32 %v56, %v297
    %v299 = vpop.f32.mrf.mxu0
    %v300 = vadd.f32 %v56, %v299
    %301 = vmatprep.mubr.f32.mxu0 0.0
    %302 = vmatmul.mubr.f32.gmra.mxu0 %v98
    %v303 = vpop.f32.mrf.mxu0
    %v304 = vadd.f32 %v61, %v303
    %v305 = vpop.f32.mrf.mxu0
    %v306 = vadd.f32 %v61, %v305
    %307 = vmatprep.mubr.f32.mxu0 0.0
    %308 = vmatmul.mubr.f32.gmra.mxu0 %v101
    %v309 = vpop.f32.mrf.mxu0
    %v310 = vadd.f32 %v66, %v309
    %v311 = vpop.f32.mrf.mxu0
    %v312 = vadd.f32 %v66, %v311
    %313 = vmatprep.mubr.f32.mxu0 0.0
    %314 = vmatmul.mubr.f32.gmra.mxu0 %v104
    %v315 = vpop.f32.mrf.mxu0
    %v316 = vadd.f32 %v71, %v315
    %v317 = vpop.f32.mrf.mxu0
    %v318 = vadd.f32 %v71, %v317
    %319 = vmatprep.mubr.f32.mxu0 0.0
    %320 = vmatmul.mubr.f32.gmra.mxu0 %v107
    %v321 = vpop.f32.mrf.mxu0
    %v322 = vadd.f32 %v76, %v321
    %v323 = vpop.f32.mrf.mxu0
    %v324 = vadd.f32 %v76, %v323
    %325 = vmatprep.mubr.f32.mxu0 0.0
    %326 = vmatmul.mubr.f32.gmra.mxu0 %v110
    %v327 = vpop.f32.mrf.mxu0
    %v328 = vadd.f32 %v81, %v327
    %v329 = vpop.f32.mrf.mxu0
    %v330 = vadd.f32 %v81, %v329
    %331 = vmatprep.mubr.f32.mxu0 0.0
    %332 = vmatmul.mubr.f32.gmra.mxu0 %v113
    %v333 = vpop.f32.mrf.mxu0
    %v334 = vadd.f32 %v86, %v333
    %v335 = vpop.f32.mrf.mxu0
    %v336 = vadd.f32 %v86, %v335
    %337 = vmatprep.mubr.f32.mxu0 0.0
    %338 = vmatmul.mubr.f32.gmra.mxu0 %v116
    %v339 = vpop.f32.mrf.mxu0
    %v340 = vadd.f32 %v91, %v339
    %v341 = vpop.f32.mrf.mxu0
    %v342 = vadd.f32 %v91, %v341
    %343 = vdwg.mxu0
    %v344 = vmax.f32 %v185, 0.0
    %v345 = vmax.f32 %v187, 0.0
    %v346 = vmax.f32 %v298, 0.0
    %v347 = vmax.f32 %v300, 0.0
    %v348 = vmax.f32 %v191, 0.0
    %v349 = vmax.f32 %v193, 0.0
    %v350 = vmax.f32 %v304, 0.0
    %v351 = vmax.f32 %v306, 0.0
    %v352 = vmax.f32 %v197, 0.0
    %v353 = vmax.f32 %v199, 0.0
    %v354 = vmax.f32 %v310, 0.0
    %v355 = vmax.f32 %v312, 0.0
    %v356 = vmax.f32 %v203, 0.0
    %v357 = vmax.f32 %v205, 0.0
    %v358 = vmax.f32 %v316, 0.0
    %v359 = vmax.f32 %v318, 0.0
    %v360 = vmax.f32 %v209, 0.0
    %v361 = vmax.f32 %v211, 0.0
    %v362 = vmax.f32 %v322, 0.0
    %v363 = vmax.f32 %v324, 0.0
    %v364 = vmax.f32 %v215, 0.0
    %v365 = vmax.f32 %v217, 0.0
    %v366 = vmax.f32 %v328, 0.0
    %v367 = vmax.f32 %v330, 0.0
    %v368 = vmax.f32 %v221, 0.0
    %v369 = vmax.f32 %v223, 0.0
    %v370 = vmax.f32 %v334, 0.0
    %v371 = vmax.f32 %v336, 0.0
    %v372 = vmax.f32 %v227, 0.0
    %v373 = vmax.f32 %v229, 0.0
    %v374 = vmax.f32 %v340, 0.0
    %v375 = vmax.f32 %v342, 0.0
    %v376 = vld [vmem:[%s3] sm:$0xff]
    %v377 = vld [vmem:[%s4] sm:$0xff]
    %379 = vset.pattern.permute.xlu0 0
    %380 = vperm.xlu0 %379, %v377
    %v381 = vpop.permute.xlu0 %380
    %vm383 = vcmask 523264
    %v385 = vsel %vm383, %v376, 0
    %387 = vmatprep.subr.mxu0 0.0
    %388 = vmatpush1.msra.mxu0 0.0
    %389 = vmatprep.subr.mxu0 0.0
    %390 = vmatpush1.msra.mxu0 0.0
    %391 = vmatprep.subr.mxu0 0.0
    %392 = vmatpush1.msra.mxu0 0.0
    %393 = vmatprep.subr.mxu0 0.0
    %394 = vmatpush1.msra.mxu0 0.0
    %395 = vmatprep.subr.mxu0 0.0
    %396 = vmatpush1.msra.mxu0 0.0
    %397 = vmatprep.subr.mxu0 0.0
    %398 = vmatpush1.msra.mxu0 0.0
    %399 = vmatprep.subr.mxu0 0.0
    %400 = vmatpush1.msra.mxu0 0.0
    %401 = vmatprep.subr.mxu0 0.0
    %402 = vmatpush1.msra.mxu0 0.0
    %403 = vmatprep.subr.mxu0 %v373
    %404 = vmatpush1.msra.mxu0 %v372
    %405 = vmatprep.subr.mxu0 %v369
    %406 = vmatpush1.msra.mxu0 %v368
    %407 = vmatprep.subr.mxu0 %v365
    %408 = vmatpush1.msra.mxu0 %v364
    %409 = vmatprep.subr.mxu0 %v361
    %410 = vmatpush1.msra.mxu0 %v360
    %411 = vmatprep.subr.mxu0 %v357
    %412 = vmatpush1.msra.mxu0 %v356
    %413 = vmatprep.subr.mxu0 %v353
    %414 = vmatpush1.msra.mxu0 %v352
    %415 = vmatprep.subr.mxu0 %v349
    %416 = vmatpush1.msra.mxu0 %v348
    %417 = vmatprep.subr.mxu0 %v345
    %418 = vmatpush1.msra.mxu0 %v344
    %419 = vmatprep.subr.mxu0 0.0
    %420 = vmatpush2.msra.mxu0 0.0
    %421 = vmatprep.subr.mxu0 0.0
    %422 = vmatpush2.msra.mxu0 0.0
    %423 = vmatprep.subr.mxu0 0.0
    %424 = vmatpush2.msra.mxu0 0.0
    %425 = vmatprep.subr.mxu0 0.0
    %426 = vmatpush2.msra.mxu0 0.0
    %427 = vmatprep.subr.mxu0 0.0
    %428 = vmatpush2.msra.mxu0 0.0
    %429 = vmatprep.subr.mxu0 0.0
    %430 = vmatpush2.msra.mxu0 0.0
    %431 = vmatprep.subr.mxu0 0.0
    %432 = vmatpush2.msra.mxu0 0.0
    %433 = vmatprep.subr.mxu0 0.0
    %434 = vmatpush2.msra.mxu0 0.0
    %435 = vmatprep.subr.mxu0 0.0
    %436 = vmatpush2.msra.mxu0 0.0
    %437 = vmatprep.subr.mxu0 0.0
    %438 = vmatpush2.msra.mxu0 0.0
    %439 = vmatprep.subr.mxu0 0.0
    %440 = vmatpush2.msra.mxu0 0.0
    %441 = vmatprep.subr.mxu0 0.0
    %442 = vmatpush2.msra.mxu0 0.0
    %443 = vmatprep.subr.mxu0 0.0
    %444 = vmatpush2.msra.mxu0 0.0
    %445 = vmatprep.subr.mxu0 0.0
    %446 = vmatpush2.msra.mxu0 0.0
    %447 = vmatprep.subr.mxu0 0.0
    %448 = vmatpush2.msra.mxu0 0.0
    %449 = vmatprep.subr.mxu0 0.0
    %450 = vmatpush2.msra.mxu0 0.0
    %451 = vmatprep.mubr.f32.mxu0 0.0
    %452 = vmatmul.mubr.f32.gmra.mxu0 %v385
    %v453 = vpop.f32.mrf.mxu0
    %v454 = vadd.f32 %v381, %v453
    %v455 = vpop.f32.mrf.mxu0
    %v456 = vadd.f32 %v381, %v455
    %457 = vdwg.mxu0
    %458 = vmatprep.subr.mxu0 0.0
    %459 = vmatpush1.msra.mxu0 0.0
    %460 = vmatprep.subr.mxu0 0.0
    %461 = vmatpush1.msra.mxu0 0.0
    %462 = vmatprep.subr.mxu0 0.0
    %463 = vmatpush1.msra.mxu0 0.0
    %464 = vmatprep.subr.mxu0 0.0
    %465 = vmatpush1.msra.mxu0 0.0
    %466 = vmatprep.subr.mxu0 0.0
    %467 = vmatpush1.msra.mxu0 0.0
    %468 = vmatprep.subr.mxu0 0.0
    %469 = vmatpush1.msra.mxu0 0.0
    %470 = vmatprep.subr.mxu0 0.0
    %471 = vmatpush1.msra.mxu0 0.0
    %472 = vmatprep.subr.mxu0 0.0
    %473 = vmatpush1.msra.mxu0 0.0
    %474 = vmatprep.subr.mxu0 %v375
    %475 = vmatpush1.msra.mxu0 %v374
    %476 = vmatprep.subr.mxu0 %v371
    %477 = vmatpush1.msra.mxu0 %v370
    %478 = vmatprep.subr.mxu0 %v367
    %479 = vmatpush1.msra.mxu0 %v366
    %480 = vmatprep.subr.mxu0 %v363
    %481 = vmatpush1.msra.mxu0 %v362
    %482 = vmatprep.subr.mxu0 %v359
    %483 = vmatpush1.msra.mxu0 %v358
    %484 = vmatprep.subr.mxu0 %v355
    %485 = vmatpush1.msra.mxu0 %v354
    %486 = vmatprep.subr.mxu0 %v351
    %487 = vmatpush1.msra.mxu0 %v350
    %488 = vmatprep.subr.mxu0 %v347
    %489 = vmatpush1.msra.mxu0 %v346
    %490 = vmatprep.subr.mxu0 0.0
    %491 = vmatpush2.msra.mxu0 0.0
    %492 = vmatprep.subr.mxu0 0.0
    %493 = vmatpush2.msra.mxu0 0.0
    %494 = vmatprep.subr.mxu0 0.0
    %495 = vmatpush2.msra.mxu0 0.0
    %496 = vmatprep.subr.mxu0 0.0
    %497 = vmatpush2.msra.mxu0 0.0
    %498 = vmatprep.subr.mxu0 0.0
    %499 = vmatpush2.msra.mxu0 0.0
    %500 = vmatprep.subr.mxu0 0.0
    %501 = vmatpush2.msra.mxu0 0.0
    %502 = vmatprep.subr.mxu0 0.0
    %503 = vmatpush2.msra.mxu0 0.0
    %504 = vmatprep.subr.mxu0 0.0
    %505 = vmatpush2.msra.mxu0 0.0
    %506 = vmatprep.subr.mxu0 0.0
    %507 = vmatpush2.msra.mxu0 0.0
    %508 = vmatprep.subr.mxu0 0.0
    %509 = vmatpush2.msra.mxu0 0.0
    %510 = vmatprep.subr.mxu0 0.0
    %511 = vmatpush2.msra.mxu0 0.0
    %512 = vmatprep.subr.mxu0 0.0
    %513 = vmatpush2.msra.mxu0 0.0
    %514 = vmatprep.subr.mxu0 0.0
    %515 = vmatpush2.msra.mxu0 0.0
    %516 = vmatprep.subr.mxu0 0.0
    %517 = vmatpush2.msra.mxu0 0.0
    %518 = vmatprep.subr.mxu0 0.0
    %519 = vmatpush2.msra.mxu0 0.0
    %520 = vmatprep.subr.mxu0 0.0
    %521 = vmatpush2.msra.mxu0 0.0
    %522 = vmatprep.mubr.f32.mxu0 0.0
    %523 = vmatmul.mubr.f32.gmra.mxu0 %v385
    %v524 = vpop.f32.mrf.mxu0
    %v525 = vadd.f32 %v381, %v524
    %v526 = vpop.f32.mrf.mxu0
    %v527 = vadd.f32 %v381, %v526
    %528 = vdwg.mxu0
    %v529 = vmax.f32 %v454, 0.0
    %v530 = vmax.f32 %v456, 0.0
    %v531 = vmax.f32 %v525, 0.0
    %v532 = vmax.f32 %v527, 0.0
    %v533 = vrot.slane %v529, 4
    %v534 = vmax.f32 %v529, %v533
    %v535 = vrot.slane %v534, 2
    %v536 = vmax.f32 %v534, %v535
    %v537 = vrot.slane %v536, 1
    %v538 = vmax.f32 %v536, %v537
    %v539 = vrot.slane %v530, 4
    %v540 = vmax.f32 %v530, %v539
    %v541 = vrot.slane %v540, 2
    %v542 = vmax.f32 %v540, %v541
    %v543 = vrot.slane %v542, 1
    %v544 = vmax.f32 %v542, %v543
    %v545 = vrot.slane %v531, 4
    %v546 = vmax.f32 %v531, %v545
    %v547 = vrot.slane %v546, 2
    %v548 = vmax.f32 %v546, %v547
    %v549 = vrot.slane %v548, 1
    %v550 = vmax.f32 %v548, %v549
    %v551 = vrot.slane %v532, 4
    %v552 = vmax.f32 %v532, %v551
    %v553 = vrot.slane %v552, 2
    %v554 = vmax.f32 %v552, %v553
    %v555 = vrot.slane %v554, 1
    %v556 = vmax.f32 %v554, %v555
    %v557 = vsub.f32 %v529, %v538
    %v558 = vsub.f32 %v530, %v544
    %v559 = vsub.f32 %v531, %v550
    %v560 = vsub.f32 %v532, %v556
    %v561 = vmul.f32 %v557, 1.442695
    %v562 = vpow.pop %v561
    %v563 = vmul.f32 %v558, 1.442695
    %v564 = vpow.pop %v563
    %v565 = vmul.f32 %v559, 1.442695
    %v566 = vpow.pop %v565
    %v567 = vmul.f32 %v560, 1.442695
    %v568 = vpow.pop %v567
    %v569 = vrot.slane %v562, 4
    %v570 = vadd.f32 %v562, %v569
    %v571 = vrot.slane %v570, 2
    %v572 = vadd.f32 %v570, %v571
    %v573 = vrot.slane %v572, 1
    %v574 = vadd.f32 %v572, %v573
    %v575 = vrot.slane %v564, 4
    %v576 = vadd.f32 %v564, %v575
    %v577 = vrot.slane %v576, 2
    %v578 = vadd.f32 %v576, %v577
    %v579 = vrot.slane %v578, 1
    %v580 = vadd.f32 %v578, %v579
    %v581 = vrot.slane %v566, 4
    %v582 = vadd.f32 %v566, %v581
    %v583 = vrot.slane %v582, 2
    %v584 = vadd.f32 %v582, %v583
    %v585 = vrot.slane %v584, 1
    %v586 = vadd.f32 %v584, %v585
    %v587 = vrot.slane %v568, 4
    %v588 = vadd.f32 %v568, %v587
    %v589 = vrot.slane %v588, 2
    %v590 = vadd.f32 %v588, %v589
    %v591 = vrot.slane %v590, 1
    %v592 = vadd.f32 %v590, %v591
    %v593 = vlog2.pop %v574
    %v594 = vmul.f32 %v593, 0.6931472
    %v595 = vlog2.pop %v580
    %v596 = vmul.f32 %v595, 0.6931472
    %v597 = vlog2.pop %v586
    %v598 = vmul.f32 %v597, 0.6931472
    %v599 = vlog2.pop %v592
    %v600 = vmul.f32 %v599, 0.6931472
    %v601 = vsub.f32 %v557, %v594
    %v602 = vsub.f32 %v558, %v596
    %v603 = vsub.f32 %v559, %v598
    %v604 = vsub.f32 %v560, %v600
    %605 = vst [vmem:[#allocation2] sm:$0xff] %v601
    %606 = vst [vmem:[#allocation2 + $0x8] sm:$0xff] %v602
    %607 = vst [vmem:[#allocation2 + $0x10] sm:$0xff] %v603
    %608 = vst [vmem:[#allocation2 + $0x18] sm:$0xff] %v604
    // Predicated region
    $region22: #{tpu_custom_call.1} parent=1 // pred_check
      _
    $region23: #{tpu_custom_call.1} parent=1 // pred_check_branch
      %610 = sbr.rel (0) target = $region25
    $region24: #{tpu_custom_call.1} parent=1 // pred_region
      %s612 = ssub.s32 512, 512
      %613 = vsyncadd [#allocation3], %s612
      %s615 = sshll.u32 [#allocation2], 4
      %s616 = int_to_ptr.vmem [resolvable:$true] %s615
      %618 = dma.vmem_to_hbm [thread:$0]  %s616, 512, %s5, [#allocation3]
    $region25: #{tpu_custom_call.1} parent=1 // pred_fallthru
      _
    // Predicated region
    $region26: #{tpu_custom_call.1} parent=1 // pred_check
      _
    $region27: #{tpu_custom_call.1} parent=1 // pred_check_branch
      %620 = sbr.rel (0) target = $region29
    $region28: #{tpu_custom_call.1} parent=1 // pred_region
      %621 = dma.done [#allocation3], 512
    $region29: #{tpu_custom_call.1} parent=1 // pred_fallthru
      _
    %622 = vsyncpa [#allocation3], 1

</llo_original>
